<compile_context>
chip_gen: v7x
topology: tpu7x:2x2x1
jax: 0.10.0
libtpu: 0.0.40
codegen_flags: <defaults>
</compile_context>

<pallas_src>
import math

import jax
import jax.numpy as jnp
from jax.experimental import pallas as pl
from jax.experimental.pallas import tpu as pltpu

# ------------------------------ hyper-params ---------------------------------
DIM = 64                 # feature dim of Attentionlayer
R = 16                   # reduction ratio
HIDDEN = DIM // R        # 4


def _round_up(n, m):
    return ((n + m - 1) // m) * m


# --------------------------------- kernel ------------------------------------
def attention_layer_kernel(x_ref, w1_ref, b1_ref, w2_ref, b2_ref, o_ref):
    # x_ref: (TN, DIM) token tile, lane-dense on DIM.
    x = x_ref[...]
    h = jnp.dot(x, w1_ref[...], preferred_element_type=jnp.float32) + b1_ref[...]
    h = jnp.maximum(h, 0.0)                                          # ReLU
    a = jnp.dot(h, w2_ref[...], preferred_element_type=jnp.float32) + b2_ref[...]
    o_ref[...] = (1.0 / (1.0 + jnp.exp(-a))).astype(o_ref.dtype)     # Sigmoid


# -------------------------------- wrapper -------------------------------------
def attention_layer_forward(inp, params, tn=1024):
    """inp: (..., dim) -> att: (..., dim, 1), matching Attentionlayer.forward."""
    w1_t, b1, w2_t, b2 = params
    *lead, dim = inp.shape
    hidden = w1_t.shape[1]

    n = math.prod(lead) if lead else 1
    x2 = inp.reshape(n, dim).astype(jnp.float32)

    # token tile: multiple of 8 sublanes, capped at `tn`
    tn = max(8, min(tn, _round_up(n, 8)))
    n_pad = _round_up(n, tn)
    if n_pad != n:
        x2 = jnp.pad(x2, ((0, n_pad - n), (0, 0)))

    grid = (n_pad // tn,)
    flops = 2 * n_pad * dim * hidden * 2          # two matmuls
    bytes_accessed = 4 * (2 * n_pad * dim + 2 * dim * hidden + dim + hidden)

    out = pl.pallas_call(
        attention_layer_kernel,
        out_shape=jax.ShapeDtypeStruct((n_pad, dim), jnp.float32),
        grid_spec=pltpu.PrefetchScalarGridSpec(
            num_scalar_prefetch=0,
            grid=grid,
            in_specs=[
                pl.BlockSpec((tn, dim), lambda i: (i, 0)),          # x tokens
                pl.BlockSpec((dim, hidden), lambda i: (0, 0)),      # W1^T
                pl.BlockSpec((1, hidden), lambda i: (0, 0)),        # b1
                pl.BlockSpec((hidden, dim), lambda i: (0, 0)),      # W2^T
                pl.BlockSpec((1, dim), lambda i: (0, 0)),           # b2
            ],
            out_specs=pl.BlockSpec((tn, dim), lambda i: (i, 0)),
        ),
        compiler_params=pltpu.CompilerParams(
            dimension_semantics=("parallel",)),
        cost_estimate=pl.CostEstimate(
            flops=flops,
            transcendentals=n_pad * dim,
            bytes_accessed=bytes_accessed),
    )(x2, w1_t, b1, w2_t, b2)

    out = out[:n].reshape(*lead, dim)
    return out[..., None]                                            # unsqueeze(-1)


# --------------------------- deterministic params -----------------------------
def init_params(key):
    k1, k2, k3, k4 = jax.random.split(key, 4)
    # nn.Linear(dim, hidden): weight (hidden, dim), bias (hidden,)
    w1 = 0.3 * jax.random.normal(k1, (HIDDEN, DIM), jnp.float32)
    b1 = 0.1 * jax.random.normal(k2, (HIDDEN,), jnp.float32)
    # nn.Linear(hidden, dim): weight (dim, hidden), bias (dim,)
    w2 = 0.3 * jax.random.normal(k3, (DIM, HIDDEN), jnp.float32)
    b2 = 0.1 * jax.random.normal(k4, (DIM,), jnp.float32)
    # store transposed (in, out) + row-vector biases for lane-dense kernel use
    return (w1.T, b1[None, :], w2.T, b2[None, :])


# --------------------------- pure-JAX reference check -------------------------
def reference_forward(inp, params):
    w1_t, b1, w2_t, b2 = params
    h = jnp.maximum(inp.astype(jnp.float32) @ w1_t + b1, 0.0)
    a = h @ w2_t + b2
    return jax.nn.sigmoid(a)[..., None]


# ----------------------------------- main --------------------------------------
if __name__ == "__main__":
    key = jax.random.PRNGKey(0)
    kx, kp = jax.random.split(key)

    B, S = 2, 8                                  # batch=2, seq=8, dim=64
    x = jax.random.normal(kx, (B, S, DIM), jnp.float32)
    params = init_params(kp)

    out = attention_layer_forward(x, params)
    out = jax.block_until_ready(out)
    assert out.shape == (B, S, DIM, 1), out.shape

    ref = reference_forward(x, params)
    max_err = float(jnp.max(jnp.abs(out - ref)))
    if max_err > 1e-4:
        raise SystemExit(f"numerical mismatch vs reference: max abs err {max_err}")

    print("KERNEL_OK")
</pallas_src>

<mosaic_0001>
module attributes {stable_mosaic.version = 11 : i64} {
  func.func @attention_layer_kernel(%arg0: i32, %arg1: memref<16x64xf32, #tpu.memory_space<vmem>>, %arg2: memref<64x4xf32, #tpu.memory_space<vmem>>, %arg3: memref<1x4xf32, #tpu.memory_space<vmem>>, %arg4: memref<4x64xf32, #tpu.memory_space<vmem>>, %arg5: memref<1x64xf32, #tpu.memory_space<vmem>>, %arg6: memref<16x64xf32, #tpu.memory_space<vmem>>) attributes {dimension_semantics = [#tpu.dimension_semantics<parallel>], iteration_bounds = array<i64: 1>, scalar_prefetch = 0 : i64, scratch_operands = 0 : i64, tpu.core_type = #tpu.core_type<tc>, window_params = [{transform_indices = @transform_0, window_bounds = array<i64: 16, 64>}, {pipeline_mode = #tpu.pipeline_mode<synchronous>, transform_indices = @transform_1, window_bounds = array<i64: 64, 4>}, {pipeline_mode = #tpu.pipeline_mode<synchronous>, transform_indices = @transform_2, window_bounds = array<i64: 1, 4>}, {pipeline_mode = #tpu.pipeline_mode<synchronous>, transform_indices = @transform_3, window_bounds = array<i64: 4, 64>}, {pipeline_mode = #tpu.pipeline_mode<synchronous>, transform_indices = @transform_4, window_bounds = array<i64: 1, 64>}, {transform_indices = @transform_5, window_bounds = array<i64: 16, 64>}]} {
    %c0 = arith.constant 0 : index
    %c0_0 = arith.constant 0 : index
    %0 = vector.load %arg1[%c0, %c0_0] : memref<16x64xf32, #tpu.memory_space<vmem>>, vector<16x64xf32>
    %c0_1 = arith.constant 0 : index
    %c0_2 = arith.constant 0 : index
    %1 = vector.load %arg2[%c0_1, %c0_2] : memref<64x4xf32, #tpu.memory_space<vmem>>, vector<64x4xf32>
    %cst = arith.constant dense<0.000000e+00> : vector<16x4xf32>
    %2 = tpu.matmul %0, %1, %cst {dimension_numbers = #tpu.dot_dimension_numbers<[1], [0], [0], [1], [0, 0, 1, 1], [], []>} : vector<16x64xf32>, vector<64x4xf32>, vector<16x4xf32> -> vector<16x4xf32>
    %c0_3 = arith.constant 0 : index
    %c0_4 = arith.constant 0 : index
    %3 = vector.load %arg3[%c0_3, %c0_4] : memref<1x4xf32, #tpu.memory_space<vmem>>, vector<1x4xf32>
    %4 = vector.broadcast %3 : vector<1x4xf32> to vector<16x4xf32>
    %5 = arith.addf %2, %4 : vector<16x4xf32>
    %cst_5 = arith.constant 0.000000e+00 : f32
    %6 = vector.broadcast %cst_5 : f32 to vector<16x4xf32>
    %7 = arith.maximumf %5, %6 : vector<16x4xf32>
    %c0_6 = arith.constant 0 : index
    %c0_7 = arith.constant 0 : index
    %8 = vector.load %arg4[%c0_6, %c0_7] : memref<4x64xf32, #tpu.memory_space<vmem>>, vector<4x64xf32>
    %cst_8 = arith.constant dense<0.000000e+00> : vector<16x64xf32>
    %9 = tpu.matmul %7, %8, %cst_8 {dimension_numbers = #tpu.dot_dimension_numbers<[1], [0], [0], [1], [0, 0, 1, 1], [], []>} : vector<16x4xf32>, vector<4x64xf32>, vector<16x64xf32> -> vector<16x64xf32>
    %c0_9 = arith.constant 0 : index
    %c0_10 = arith.constant 0 : index
    %10 = vector.load %arg5[%c0_9, %c0_10] : memref<1x64xf32, #tpu.memory_space<vmem>>, vector<1x64xf32>
    %11 = vector.broadcast %10 : vector<1x64xf32> to vector<16x64xf32>
    %12 = arith.addf %9, %11 : vector<16x64xf32>
    %cst_11 = arith.constant 0.000000e+00 : f32
    %13 = vector.broadcast %cst_11 : f32 to vector<16x64xf32>
    %14 = arith.subf %13, %12 : vector<16x64xf32>
    %15 = math.exp %14 : vector<16x64xf32>
    %cst_12 = arith.constant 1.000000e+00 : f32
    %16 = vector.broadcast %cst_12 : f32 to vector<16x64xf32>
    %17 = arith.addf %16, %15 : vector<16x64xf32>
    %cst_13 = arith.constant 1.000000e+00 : f32
    %18 = vector.broadcast %cst_13 : f32 to vector<16x64xf32>
    %19 = arith.divf %18, %17 : vector<16x64xf32>
    %c0_14 = arith.constant 0 : index
    %c0_15 = arith.constant 0 : index
    %20 = vector.load %arg6[%c0_14, %c0_15] : memref<16x64xf32, #tpu.memory_space<vmem>>, vector<16x64xf32>
    tpu.vector_store %arg6[%c0_14, %c0_15], %19 {strides = array<i32>} : memref<16x64xf32, #tpu.memory_space<vmem>>, vector<16x64xf32>,
    return
  }
  func.func @transform_0(%arg0: i32) -> (i32, i32) {
    %c0_i32 = arith.constant 0 : i32
    %c0_i32_0 = arith.constant 0 : i32
    return %arg0, %c0_i32 : i32, i32
  }
  func.func @transform_1(%arg0: i32) -> (i32, i32) {
    %c0_i32 = arith.constant 0 : i32
    %c0_i32_0 = arith.constant 0 : i32
    %c0_i32_1 = arith.constant 0 : i32
    return %c0_i32, %c0_i32_0 : i32, i32
  }
  func.func @transform_2(%arg0: i32) -> (i32, i32) {
    %c0_i32 = arith.constant 0 : i32
    %c0_i32_0 = arith.constant 0 : i32
    %c0_i32_1 = arith.constant 0 : i32
    return %c0_i32, %c0_i32_0 : i32, i32
  }
  func.func @transform_3(%arg0: i32) -> (i32, i32) {
    %c0_i32 = arith.constant 0 : i32
    %c0_i32_0 = arith.constant 0 : i32
    %c0_i32_1 = arith.constant 0 : i32
    return %c0_i32, %c0_i32_0 : i32, i32
  }
  func.func @transform_4(%arg0: i32) -> (i32, i32) {
    %c0_i32 = arith.constant 0 : i32
    %c0_i32_0 = arith.constant 0 : i32
    %c0_i32_1 = arith.constant 0 : i32
    return %c0_i32, %c0_i32_0 : i32, i32
  }
  func.func @transform_5(%arg0: i32) -> (i32, i32) {
    %c0_i32 = arith.constant 0 : i32
    %c0_i32_0 = arith.constant 0 : i32
    return %arg0, %c0_i32 : i32, i32
  }
}

</mosaic_0001>

<llo_original>
// kernel: tpu_custom_call.1
$region0: #{tpu_custom_call.1}
  #allocation0 [shape = 'u32[]', space=smem, size = 0x4, offset = 0x4, fixed_abs, tag = 'smem constant byte address 0x4 - core index']
  #allocation1 [shape = 'u32[144,128]{1,0:T(1,128)}', space=vmem, size = 0x12000, scoped, tag = 'internal scratch']
  %s0 = inlined_call_operand.vmem [shape: f32[16,64], index: 0, kind: input, shape index: {}]
  %s1 = inlined_call_operand.vmem [shape: f32[64,4], index: 1, kind: input, shape index: {}]
  %s2 = inlined_call_operand.vmem [shape: f32[1,4], index: 2, kind: input, shape index: {}]
  %s3 = inlined_call_operand.vmem [shape: f32[4,64], index: 3, kind: input, shape index: {}]
  %s4 = inlined_call_operand.vmem [shape: f32[1,64], index: 4, kind: input, shape index: {}]
  %s5 = inlined_call_operand.hbm [shape: f32[16,64], index: 5, kind: output, shape index: {}]
  %s6 = sld [smem:[#allocation0]]
  $region30: #{tpu_custom_call.1} parent=0
    _
  %s8 = ssub.s32 1, %s6
  %s9 = scalar_select 0, %s8, %s6
  $region1: #{tpu_custom_call.1} parent=0
    #allocation2 [shape = 'u8[8192]{0}', space=vmem, size = 0x2000, scoped, tag = 'output window, operand 0, single buffered']
    #allocation3 [shape = 's32[1]{0}', space=sflag, size = 0x4, scoped, tag = 'scoped memory for tpu_custom_call.1']
    %10 = vsyncpa [#allocation3], 0
    // Predicated region
    $region2: #{tpu_custom_call.1} parent=1 // pred_check
      _
    $region3: #{tpu_custom_call.1} parent=1 // pred_check_branch
      %12 = sbr.rel (0) target = $region5
    $region4: #{tpu_custom_call.1} parent=1 // pred_region
      _
    $region5: #{tpu_custom_call.1} parent=1 // pred_fallthru
      _
    // Predicated region
    $region6: #{tpu_custom_call.1} parent=1 // pred_check
      _
    $region7: #{tpu_custom_call.1} parent=1 // pred_check_branch
      %14 = sbr.rel (0) target = $region9
    $region8: #{tpu_custom_call.1} parent=1 // pred_region
      _
    $region9: #{tpu_custom_call.1} parent=1 // pred_fallthru
      _
    // Predicated region
    $region10: #{tpu_custom_call.1} parent=1 // pred_check
      _
    $region11: #{tpu_custom_call.1} parent=1 // pred_check_branch
      %16 = sbr.rel (0) target = $region13
    $region12: #{tpu_custom_call.1} parent=1 // pred_region
      _
    $region13: #{tpu_custom_call.1} parent=1 // pred_fallthru
      _
    // Predicated region
    $region14: #{tpu_custom_call.1} parent=1 // pred_check
      _
    $region15: #{tpu_custom_call.1} parent=1 // pred_check_branch
      %18 = sbr.rel (0) target = $region17
    $region16: #{tpu_custom_call.1} parent=1 // pred_region
      _
    $region17: #{tpu_custom_call.1} parent=1 // pred_fallthru
      _
    // Predicated region
    $region18: #{tpu_custom_call.1} parent=1 // pred_check
      _
    $region19: #{tpu_custom_call.1} parent=1 // pred_check_branch
      %20 = sbr.rel (0) target = $region21
    $region20: #{tpu_custom_call.1} parent=1 // pred_region
      _
    $region21: #{tpu_custom_call.1} parent=1 // pred_fallthru
      _
    %v21 = vld [vmem:[%s0] sm:$0xff]
    %v22 = vld [vmem:[%s0 + $0x8] sm:$0xff]
    %v23 = vld [vmem:[%s1] sm:$0xff]
    %v24 = vld [vmem:[%s1 + $0x8] sm:$0xff]
    %v25 = vld [vmem:[%s1 + $0x10] sm:$0xff]
    %v26 = vld [vmem:[%s1 + $0x18] sm:$0xff]
    %v27 = vld [vmem:[%s1 + $0x20] sm:$0xff]
    %v28 = vld [vmem:[%s1 + $0x28] sm:$0xff]
    %v29 = vld [vmem:[%s1 + $0x30] sm:$0xff]
    %v30 = vld [vmem:[%s1 + $0x38] sm:$0xff]
    %v31 = vld [vmem:[%s2] sm:$0x1]
    %v33 = vlaneseq
    %v34 = vshrl.u32 %v33, 7
    %v35 = vsub.s32 0, %v34
    %v36 = vrot.slane %v31, %v35
    %vm38 = vcmask 523264
    %v40 = vsel %vm38, %v21, 0
    %v43 = vsel %vm38, %v22, 0
    %45 = vmatprep.subr.mxu0 0.0
    %46 = vmatpush1.msra.mxu0 %v23
    %47 = vmatprep.subr.mxu0 0.0
    %48 = vmatpush1.msra.mxu0 %v24
    %49 = vmatprep.subr.mxu0 0.0
    %50 = vmatpush1.msra.mxu0 %v25
    %51 = vmatprep.subr.mxu0 0.0
    %52 = vmatpush1.msra.mxu0 %v26
    %53 = vmatprep.subr.mxu0 0.0
    %54 = vmatpush1.msra.mxu0 %v27
    %55 = vmatprep.subr.mxu0 0.0
    %56 = vmatpush1.msra.mxu0 %v28
    %57 = vmatprep.subr.mxu0 0.0
    %58 = vmatpush1.msra.mxu0 %v29
    %59 = vmatprep.subr.mxu0 0.0
    %60 = vmatpush1.msra.mxu0 %v30
    %61 = vmatprep.subr.mxu0 0.0
    %62 = vmatpush1.msra.mxu0 0.0
    %63 = vmatprep.subr.mxu0 0.0
    %64 = vmatpush1.msra.mxu0 0.0
    %65 = vmatprep.subr.mxu0 0.0
    %66 = vmatpush1.msra.mxu0 0.0
    %67 = vmatprep.subr.mxu0 0.0
    %68 = vmatpush1.msra.mxu0 0.0
    %69 = vmatprep.subr.mxu0 0.0
    %70 = vmatpush1.msra.mxu0 0.0
    %71 = vmatprep.subr.mxu0 0.0
    %72 = vmatpush1.msra.mxu0 0.0
    %73 = vmatprep.subr.mxu0 0.0
    %74 = vmatpush1.msra.mxu0 0.0
    %75 = vmatprep.subr.mxu0 0.0
    %76 = vmatpush1.msra.mxu0 0.0
    %77 = vmatprep.subr.mxu0 0.0
    %78 = vmatpush1.msra.mxu0 0.0
    %79 = vmatprep.subr.mxu0 0.0
    %80 = vmatpush1.msra.mxu0 0.0
    %81 = vmatprep.subr.mxu0 0.0
    %82 = vmatpush1.msra.mxu0 0.0
    %83 = vmatprep.subr.mxu0 0.0
    %84 = vmatpush1.msra.mxu0 0.0
    %85 = vmatprep.subr.mxu0 0.0
    %86 = vmatpush1.msra.mxu0 0.0
    %87 = vmatprep.subr.mxu0 0.0
    %88 = vmatpush1.msra.mxu0 0.0
    %89 = vmatprep.subr.mxu0 0.0
    %90 = vmatpush1.msra.mxu0 0.0
    %91 = vmatprep.subr.mxu0 0.0
    %92 = vmatpush1.msra.mxu0 0.0
    %93 = vmatprep.subr.mxu0 0.0
    %94 = vmatpush1.msra.mxu0 0.0
    %95 = vmatprep.subr.mxu0 0.0
    %96 = vmatpush1.msra.mxu0 0.0
    %97 = vmatprep.subr.mxu0 0.0
    %98 = vmatpush1.msra.mxu0 0.0
    %99 = vmatprep.subr.mxu0 0.0
    %100 = vmatpush1.msra.mxu0 0.0
    %101 = vmatprep.subr.mxu0 0.0
    %102 = vmatpush1.msra.mxu0 0.0
    %103 = vmatprep.subr.mxu0 0.0
    %104 = vmatpush1.msra.mxu0 0.0
    %105 = vmatprep.subr.mxu0 0.0
    %106 = vmatpush1.msra.mxu0 0.0
    %107 = vmatprep.subr.mxu0 0.0
    %108 = vmatpush1.msra.mxu0 0.0
    %109 = vmatprep.mubr.f32.mxu0 0.0
    %110 = vmatmul.mubr.f32.gmra.mrb[0].mxu0 %v40
    %v111 = vpop.f32.mrb[0].mxu0
    %v112 = vadd.f32 %v36, %v111
    %v113 = vpop.f32.mrb[0].mxu0
    %114 = vmatprep.mubr.f32.mxu0 0.0
    %115 = vmatmul.mubr.f32.gmra.mrb[0].mxu0 %v43
    %v116 = vpop.f32.mrb[0].mxu0
    %v117 = vadd.f32 %v36, %v116
    %v118 = vpop.f32.mrb[0].mxu0
    %119 = vdwg.mxu0
    %v120 = vmax.f32 %v112, 0.0
    %v121 = vmax.f32 %v117, 0.0
    %v122 = vld [vmem:[%s3] sm:$0xf]
    %v123 = vld [vmem:[%s4] sm:$0x1]
    %v125 = vlaneseq
    %v126 = vshrl.u32 %v125, 7
    %v127 = vsub.s32 0, %v126
    %v128 = vrot.slane %v123, %v127
    %vm130 = vcmask 31744
    %v132 = vsel %vm130, %v120, 0
    %v135 = vsel %vm130, %v121, 0
    %vm137 = vcmask 1043456
    %v139 = vsel %vm137, %v122, 0
    %141 = vmatprep.subr.mxu0 0.0
    %142 = vmatpush1.msra.mxu0 %v139
    %143 = vmatprep.subr.mxu0 0.0
    %144 = vmatpush1.msra.mxu0 0.0
    %145 = vmatprep.subr.mxu0 0.0
    %146 = vmatpush1.msra.mxu0 0.0
    %147 = vmatprep.subr.mxu0 0.0
    %148 = vmatpush1.msra.mxu0 0.0
    %149 = vmatprep.subr.mxu0 0.0
    %150 = vmatpush1.msra.mxu0 0.0
    %151 = vmatprep.subr.mxu0 0.0
    %152 = vmatpush1.msra.mxu0 0.0
    %153 = vmatprep.subr.mxu0 0.0
    %154 = vmatpush1.msra.mxu0 0.0
    %155 = vmatprep.subr.mxu0 0.0
    %156 = vmatpush1.msra.mxu0 0.0
    %157 = vmatprep.subr.mxu0 0.0
    %158 = vmatpush1.msra.mxu0 0.0
    %159 = vmatprep.subr.mxu0 0.0
    %160 = vmatpush1.msra.mxu0 0.0
    %161 = vmatprep.subr.mxu0 0.0
    %162 = vmatpush1.msra.mxu0 0.0
    %163 = vmatprep.subr.mxu0 0.0
    %164 = vmatpush1.msra.mxu0 0.0
    %165 = vmatprep.subr.mxu0 0.0
    %166 = vmatpush1.msra.mxu0 0.0
    %167 = vmatprep.subr.mxu0 0.0
    %168 = vmatpush1.msra.mxu0 0.0
    %169 = vmatprep.subr.mxu0 0.0
    %170 = vmatpush1.msra.mxu0 0.0
    %171 = vmatprep.subr.mxu0 0.0
    %172 = vmatpush1.msra.mxu0 0.0
    %173 = vmatprep.subr.mxu0 0.0
    %174 = vmatpush1.msra.mxu0 0.0
    %175 = vmatprep.subr.mxu0 0.0
    %176 = vmatpush1.msra.mxu0 0.0
    %177 = vmatprep.subr.mxu0 0.0
    %178 = vmatpush1.msra.mxu0 0.0
    %179 = vmatprep.subr.mxu0 0.0
    %180 = vmatpush1.msra.mxu0 0.0
    %181 = vmatprep.subr.mxu0 0.0
    %182 = vmatpush1.msra.mxu0 0.0
    %183 = vmatprep.subr.mxu0 0.0
    %184 = vmatpush1.msra.mxu0 0.0
    %185 = vmatprep.subr.mxu0 0.0
    %186 = vmatpush1.msra.mxu0 0.0
    %187 = vmatprep.subr.mxu0 0.0
    %188 = vmatpush1.msra.mxu0 0.0
    %189 = vmatprep.subr.mxu0 0.0
    %190 = vmatpush1.msra.mxu0 0.0
    %191 = vmatprep.subr.mxu0 0.0
    %192 = vmatpush1.msra.mxu0 0.0
    %193 = vmatprep.subr.mxu0 0.0
    %194 = vmatpush1.msra.mxu0 0.0
    %195 = vmatprep.subr.mxu0 0.0
    %196 = vmatpush1.msra.mxu0 0.0
    %197 = vmatprep.subr.mxu0 0.0
    %198 = vmatpush1.msra.mxu0 0.0
    %199 = vmatprep.subr.mxu0 0.0
    %200 = vmatpush1.msra.mxu0 0.0
    %201 = vmatprep.subr.mxu0 0.0
    %202 = vmatpush1.msra.mxu0 0.0
    %203 = vmatprep.subr.mxu0 0.0
    %204 = vmatpush1.msra.mxu0 0.0
    %205 = vmatprep.mubr.f32.mxu0 0.0
    %206 = vmatmul.mubr.f32.gmra.mrb[0].mxu0 %v132
    %v207 = vpop.f32.mrb[0].mxu0
    %v208 = vadd.f32 %v128, %v207
    %v209 = vpop.f32.mrb[0].mxu0
    %210 = vmatprep.mubr.f32.mxu0 0.0
    %211 = vmatmul.mubr.f32.gmra.mrb[0].mxu0 %v135
    %v212 = vpop.f32.mrb[0].mxu0
    %v213 = vadd.f32 %v128, %v212
    %v214 = vpop.f32.mrb[0].mxu0
    %215 = vdwg.mxu0
    %v216 = vsub.f32 0.0, %v208
    %v217 = vsub.f32 0.0, %v213
    %v218 = vmul.f32 %v216, 1.442695
    %v219 = vpow.pop %v218
    %v220 = vmul.f32 %v217, 1.442695
    %v221 = vpow.pop %v220
    %v222 = vadd.f32 %v219, 1.0
    %v223 = vadd.f32 %v221, 1.0
    %v224 = vrcp.pop %v222
    %v225 = vmul.f32 1.0, %v224
    %v226 = vrcp.pop %v223
    %v227 = vmul.f32 1.0, %v226
    %228 = vst.msk [vmem:[#allocation2] sm:$0xff] %vm38, %v225
    %229 = vst.msk [vmem:[#allocation2 + $0x8] sm:$0xff] %vm38, %v227
    // Predicated region
    $region22: #{tpu_custom_call.1} parent=1 // pred_check
      _
    $region23: #{tpu_custom_call.1} parent=1 // pred_check_branch
      %231 = sbr.rel (0) target = $region25
    $region24: #{tpu_custom_call.1} parent=1 // pred_region
      %s233 = ssub.s32 256, 256
      %234 = vsyncadd [#allocation3], %s233
      %s235 = sshll.u32 [#allocation2], 4
      %s236 = int_to_ptr.vmem [resolvable:$true] %s235
      %241 = dma.vmem_to_hbm [thread:$0]  %s236, 256, %s5, [#allocation3], 128, 128, 8
    $region25: #{tpu_custom_call.1} parent=1 // pred_fallthru
      _
    // Predicated region
    $region26: #{tpu_custom_call.1} parent=1 // pred_check
      _
    $region27: #{tpu_custom_call.1} parent=1 // pred_check_branch
      %243 = sbr.rel (0) target = $region29
    $region28: #{tpu_custom_call.1} parent=1 // pred_region
      %244 = dma.done [#allocation3], 256
    $region29: #{tpu_custom_call.1} parent=1 // pred_fallthru
      _
    %245 = vsyncpa [#allocation3], 1

</llo_original>
